<compile_context>
chip_gen: v5e
topology: v5e:2x2
jax: 0.10.0
libtpu: 0.0.40
codegen_flags: <defaults>
</compile_context>

<pallas_src>
import functools

import jax
import jax.numpy as jnp
from jax.experimental import pallas as pl
from jax.experimental.pallas import tpu as pltpu


_HAS_BUFFERED = hasattr(pl, "Buffered")  # explicit capability check (not try/except at call time)


def _round_up(n, m):
    return ((n + m - 1) // m) * m


def _pad2(a, rows, cols):
    """Zero-pad a 2-D array up to (rows, cols)."""
    return jnp.pad(a, ((0, rows - a.shape[0]), (0, cols - a.shape[1])))


def _const_spec(shape):
    """Full-array block whose block index never changes across the grid.

    Grid-invariant weights/biases get single buffering (no useless second
    buffer) when the installed Pallas supports `pipeline_mode`.
    """
    idx = lambda i, k, _n=len(shape): (0,) * _n
    if _HAS_BUFFERED:
        return pl.BlockSpec(shape, idx, pipeline_mode=pl.Buffered(1))
    return pl.BlockSpec(shape, idx)


def _silu(h):
    # silu(h) = h * sigmoid(h) = h * 1/(1 + exp(-h)).
    # One EUP exp + approximate reciprocal (near-free) instead of exp + full
    # precision divide: halves the EUP pushes per element on v6e/v7x.
    return h * pl.reciprocal(1.0 + jnp.exp(-h), approx=True)


def _flow_mlp_kernel(t_ref, x_ref, w1x_ref, w1t_ref, b1_ref,
                     w2_ref, b2_ref, w3_ref, b3_ref, o_ref, acc_ref):
    """Fused time-conditioned MLP with K-tiled hidden matmul.

    Grid = (batch tiles [parallel], hidden chunks [arbitrary]).
    Per chunk k:  h1_k = silu(x @ W1x[:, k] + t*w1t[k] + b1[k])
                  acc += h1_k @ W2[k, :]
    Finalize:     out  = silu(acc + b2) @ W3 + b3
    """
    k = pl.program_id(1)
    nk = pl.num_programs(1)

    @pl.when(k == 0)
    def _():
        acc_ref[...] = jnp.zeros_like(acc_ref)

    t = t_ref[0, 0]                              # scalar time from SMEM
    x = x_ref[...].astype(jnp.bfloat16)          # in-kernel cast, free under MXU

    # Layer 1 (hidden-dim chunk). Fold the (1, tk) bias terms first so only
    # one full-tile VALU add is emitted.
    h1 = jnp.dot(x, w1x_ref[...], preferred_element_type=jnp.float32)
    h1 = h1 + (t * w1t_ref[...] + b1_ref[...])
    h1 = _silu(h1)

    # Layer 2 partial product, accumulated in f32 VMEM scratch.
    acc_ref[...] += jnp.dot(h1.astype(jnp.bfloat16), w2_ref[...],
                            preferred_element_type=jnp.float32)

    @pl.when(k == nk - 1)
    def _():
        h2 = _silu(acc_ref[...] + b2_ref[...])
        out = jnp.dot(h2.astype(jnp.bfloat16), w3_ref[...],
                      preferred_element_type=jnp.float32)
        o_ref[...] = (out + b3_ref[...]).astype(o_ref.dtype)


def _vmem_limit_bytes(tile_b, Dp, Hp, tk, x_itemsize, out_itemsize):
    """Size the scoped VMEM limit to actual need (+headroom), capped at 48 MiB."""
    need = (
        2 * tile_b * Dp * x_itemsize        # x tiles (double-buffered)
        + 2 * tile_b * Dp * out_itemsize    # out tiles
        + 2 * Dp * tk * 2                   # w1x chunk (bf16)
        + 2 * 2 * tk * 4                    # w1t + b1 chunks (f32)
        + 2 * tk * Hp * 2                   # w2 chunk (bf16)
        + Hp * Dp * 2                       # w3 (single-buffered const)
        + (Hp + Dp) * 4                     # b2, b3
        + tile_b * Hp * 4                   # f32 accumulator scratch
    )
    headroom = 8 * 1024 * 1024              # Mosaic scratch / h1,h2 spills
    # floor = default scoped limit; cap < v7x's 64 MiB/TC so the compiler
    # keeps slack for internal scratch.
    return int(min(max(need + headroom, 32 * 1024 * 1024), 48 * 1024 * 1024))


def prepare_padded_params(params):
    """Pad / cast model params once (hoisted out of the per-step forward).

    Flow-model forwards run many times per ODE solve with identical weights;
    padding + bf16 casting here avoids re-reading/re-writing every weight in
    HBM on each call.
    """
    w1x, w1t, b1, w2, b2, w3, b3 = params
    d, h = w1x.shape
    dp, hp = _round_up(d, 128), _round_up(h, 128)
    return (
        _pad2(w1x.astype(jnp.bfloat16), dp, hp),   # MXU operands in bf16
        _pad2(w1t.astype(jnp.float32), 1, hp),     # bias-like terms stay f32
        _pad2(b1.astype(jnp.float32), 1, hp),
        _pad2(w2.astype(jnp.bfloat16), hp, hp),
        _pad2(b2.astype(jnp.float32), 1, hp),
        _pad2(w3.astype(jnp.bfloat16), hp, dp),
        _pad2(b3.astype(jnp.float32), 1, dp),
    )


@functools.partial(jax.jit, static_argnames=("tile_b", "tk", "out_dtype"))
def flow_model_wrapper_forward(t, x, padded_params, *, tile_b=256, tk=None,
                               out_dtype=None):
    """JAX/Pallas equivalent of flow_model_torch_wrapper(model).forward(t, x).

    tile_b: batch tile.  Bigger (512) amortizes per-step overhead on
            v5e/v6e (128 MiB VMEM); keep 128-256 on v7x (64 MiB/TC).
    tk:     hidden-dim chunk for the K-tiled layer-2 matmul (default: 512 if
            it divides the padded H, else the full padded H).
    """
    B, D = x.shape
    w1x_p, w1t_p, b1_p, w2_p, b2_p, w3_p, b3_p = padded_params
    Dp, Hp = w1x_p.shape
    out_dtype = x.dtype if out_dtype is None else out_dtype

    if tk is None:
        tk = 512 if Hp % 512 == 0 else Hp
    tk = min(tk, Hp)
    if Hp % tk != 0:
        tk = Hp
    Bp = _round_up(B, tile_b)

    # Pad x only when needed; keep original dtype (cast to bf16 in-kernel).
    x_p = x if (Bp == B and Dp == D) else _pad2(x, Bp, Dp)

    # t may be a python/0-d scalar (torchdyn convention); reshape for SMEM.
    t_arr = jnp.asarray(t, dtype=jnp.float32).reshape(1, 1)

    grid = (Bp // tile_b, Hp // tk)

    out = pl.pallas_call(
        _flow_mlp_kernel,
        out_shape=jax.ShapeDtypeStruct((Bp, Dp), out_dtype),
        grid_spec=pltpu.PrefetchScalarGridSpec(
            num_scalar_prefetch=0,
            grid=grid,
            in_specs=[
                pl.BlockSpec(memory_space=pltpu.MemorySpace.SMEM),     # t (1,1)
                pl.BlockSpec((tile_b, Dp), lambda i, k: (i, 0)),       # x tile
                pl.BlockSpec((Dp, tk), lambda i, k: (0, k)),           # w1x chunk
                pl.BlockSpec((1, tk), lambda i, k: (0, k)),            # w1t chunk
                pl.BlockSpec((1, tk), lambda i, k: (0, k)),            # b1 chunk
                pl.BlockSpec((tk, Hp), lambda i, k: (k, 0)),           # w2 chunk
                _const_spec((1, Hp)),                                  # b2
                _const_spec((Hp, Dp)),                                 # w3
                _const_spec((1, Dp)),                                  # b3
            ],
            out_specs=pl.BlockSpec((tile_b, Dp), lambda i, k: (i, 0)),
            scratch_shapes=[pltpu.VMEM((tile_b, Hp), jnp.float32)],    # layer-2 acc
        ),
        compiler_params=pltpu.CompilerParams(
            dimension_semantics=("parallel", "arbitrary"),
            vmem_limit_bytes=_vmem_limit_bytes(
                tile_b, Dp, Hp, tk, x.dtype.itemsize,
                jnp.dtype(out_dtype).itemsize)),
    )(t_arr, x_p, w1x_p, w1t_p, b1_p, w2_p, b2_p, w3_p, b3_p)

    # Drop batch tail + lane padding (no-op copy skipped when shapes match).
    if Bp == B and Dp == D:
        return out
    return out[:B, :D]


def _reference_forward(t, x, params):
    """Pure-JAX reference mirroring the kernel numerics (bf16 MXU, f32 acc)."""
    w1x, w1t, b1, w2, b2, w3, b3 = params
    t = jnp.asarray(t, jnp.float32)
    h1 = jnp.dot(x.astype(jnp.bfloat16), w1x.astype(jnp.bfloat16),
                 preferred_element_type=jnp.float32)
    h1 = jax.nn.silu(h1 + t * w1t + b1)
    h2 = jnp.dot(h1.astype(jnp.bfloat16), w2.astype(jnp.bfloat16),
                 preferred_element_type=jnp.float32)
    h2 = jax.nn.silu(h2 + b2)
    out = jnp.dot(h2.astype(jnp.bfloat16), w3.astype(jnp.bfloat16),
                  preferred_element_type=jnp.float32)
    return out + b3


def _init_params(key, d, h):
    """Deterministic synthetic init (Linear(D+1,H) / (H,H) / (H,D) MLP)."""
    ks = jax.random.split(key, 7)
    scale1 = 1.0 / jnp.sqrt(d + 1.0)
    scale2 = 1.0 / jnp.sqrt(float(h))
    w1x = jax.random.normal(ks[0], (d, h), jnp.float32) * scale1
    w1t = jax.random.normal(ks[1], (1, h), jnp.float32) * scale1
    b1 = jax.random.normal(ks[2], (1, h), jnp.float32) * 0.01
    w2 = jax.random.normal(ks[3], (h, h), jnp.float32) * scale2
    b2 = jax.random.normal(ks[4], (1, h), jnp.float32) * 0.01
    w3 = jax.random.normal(ks[5], (h, d), jnp.float32) * scale2
    b3 = jax.random.normal(ks[6], (1, d), jnp.float32) * 0.01
    return (w1x, w1t, b1, w2, b2, w3, b3)


if __name__ == "__main__":
    key = jax.random.PRNGKey(0)
    k_x, k_p = jax.random.split(key)

    # Small test shapes; B deliberately NOT a multiple of the tile so the
    # round-up/slice tail path is exercised; tile_b=128 -> 2 parallel batch
    # steps (both v7x TensorCores busy); Hp=128 -> single K chunk.
    B, D, H = 200, 32, 64
    x = jax.random.normal(k_x, (B, D), jnp.float32)
    t = jnp.float32(0.5)            # torchdyn passes a scalar time
    params = _init_params(k_p, D, H)

    # Hoisted: pad/cast weights once, reuse across all ODE-solver steps.
    padded_params = prepare_padded_params(params)

    out = flow_model_wrapper_forward(t, x, padded_params, tile_b=128)
    out = jax.block_until_ready(out)

    ref = _reference_forward(t, x, params)
    assert out.shape == (B, D)
    max_err = float(jnp.max(jnp.abs(out - ref)))
    assert jnp.allclose(out, ref, atol=1e-2, rtol=1e-2), (
        f"mismatch vs reference, max abs err {max_err}")

    print("KERNEL_OK")
</pallas_src>

<mosaic_0001>
module attributes {stable_mosaic.version = 11 : i64} {
  func.func @_flow_mlp_kernel(%arg0: i32, %arg1: i32, %arg2: memref<1x1xf32, #tpu.memory_space<smem>>, %arg3: memref<128x128xf32, #tpu.memory_space<vmem>>, %arg4: memref<128x128xbf16, #tpu.memory_space<vmem>>, %arg5: memref<1x128xf32, #tpu.memory_space<vmem>>, %arg6: memref<1x128xf32, #tpu.memory_space<vmem>>, %arg7: memref<128x128xbf16, #tpu.memory_space<vmem>>, %arg8: memref<1x128xf32, #tpu.memory_space<vmem>>, %arg9: memref<128x128xbf16, #tpu.memory_space<vmem>>, %arg10: memref<1x128xf32, #tpu.memory_space<vmem>>, %arg11: memref<128x128xf32, #tpu.memory_space<vmem>>, %arg12: memref<128x128xf32, #tpu.memory_space<vmem>>) attributes {dimension_semantics = [#tpu.dimension_semantics<parallel>, #tpu.dimension_semantics<arbitrary>], iteration_bounds = array<i64: 2, 1>, scalar_prefetch = 0 : i64, scratch_operands = 1 : i64, tpu.core_type = #tpu.core_type<tc>, window_params = [{transform_indices = @transform_0, window_bounds = array<i64: 1, 1>}, {transform_indices = @transform_1, window_bounds = array<i64: 128, 128>}, {transform_indices = @transform_2, window_bounds = array<i64: 128, 128>}, {transform_indices = @transform_3, window_bounds = array<i64: 1, 128>}, {transform_indices = @transform_4, window_bounds = array<i64: 1, 128>}, {transform_indices = @transform_5, window_bounds = array<i64: 128, 128>}, {pipeline_mode = #tpu.pipeline_mode<synchronous>, transform_indices = @transform_6, window_bounds = array<i64: 1, 128>}, {pipeline_mode = #tpu.pipeline_mode<synchronous>, transform_indices = @transform_7, window_bounds = array<i64: 128, 128>}, {pipeline_mode = #tpu.pipeline_mode<synchronous>, transform_indices = @transform_8, window_bounds = array<i64: 1, 128>}, {transform_indices = @transform_9, window_bounds = array<i64: 128, 128>}]} {
    %c0_i32 = arith.constant 0 : i32
    %0 = arith.cmpi eq, %arg1, %c0_i32 : i32
    %1 = arith.extui %0 : i1 to i32
    %c0_i32_0 = arith.constant 0 : i32
    %2 = arith.cmpi ne, %1, %c0_i32_0 : i32
    scf.if %2 {
      %cst_21 = arith.constant 0.000000e+00 : f32
      %31 = vector.broadcast %cst_21 : f32 to vector<128x128xf32>
      %c0_22 = arith.constant 0 : index
      %c0_23 = arith.constant 0 : index
      %32 = vector.load %arg12[%c0_22, %c0_23] : memref<128x128xf32, #tpu.memory_space<vmem>>, vector<128x128xf32>
      tpu.vector_store %arg12[%c0_22, %c0_23], %31 {strides = array<i32>} : memref<128x128xf32, #tpu.memory_space<vmem>>, vector<128x128xf32>,
    } else {
    }
    %c0 = arith.constant 0 : index
    %c0_1 = arith.constant 0 : index
    %3 = memref.load %arg2[%c0, %c0_1] : memref<1x1xf32, #tpu.memory_space<smem>>
    %c0_2 = arith.constant 0 : index
    %c0_3 = arith.constant 0 : index
    %4 = vector.load %arg3[%c0_2, %c0_3] : memref<128x128xf32, #tpu.memory_space<vmem>>, vector<128x128xf32>
    %5 = arith.truncf %4 : vector<128x128xf32> to vector<128x128xbf16>
    %c0_4 = arith.constant 0 : index
    %c0_5 = arith.constant 0 : index
    %6 = vector.load %arg4[%c0_4, %c0_5] : memref<128x128xbf16, #tpu.memory_space<vmem>>, vector<128x128xbf16>
    %cst = arith.constant dense<0.000000e+00> : vector<128x128xf32>
    %7 = tpu.matmul %5, %6, %cst {dimension_numbers = #tpu.dot_dimension_numbers<[1], [0], [0], [1], [0, 0, 1, 1], [], []>} : vector<128x128xbf16>, vector<128x128xbf16>, vector<128x128xf32> -> vector<128x128xf32>
    %c0_6 = arith.constant 0 : index
    %c0_7 = arith.constant 0 : index
    %8 = vector.load %arg5[%c0_6, %c0_7] : memref<1x128xf32, #tpu.memory_space<vmem>>, vector<1x128xf32>
    %9 = vector.broadcast %3 : f32 to vector<1x128xf32>
    %10 = arith.mulf %9, %8 : vector<1x128xf32>
    %c0_8 = arith.constant 0 : index
    %c0_9 = arith.constant 0 : index
    %11 = vector.load %arg6[%c0_8, %c0_9] : memref<1x128xf32, #tpu.memory_space<vmem>>, vector<1x128xf32>
    %12 = arith.addf %10, %11 : vector<1x128xf32>
    %13 = vector.broadcast %12 : vector<1x128xf32> to vector<128x128xf32>
    %14 = arith.addf %7, %13 : vector<128x128xf32>
    %cst_10 = arith.constant 0.000000e+00 : f32
    %15 = vector.broadcast %cst_10 : f32 to vector<128x128xf32>
    %16 = arith.subf %15, %14 : vector<128x128xf32>
    %17 = math.exp %16 : vector<128x128xf32>
    %cst_11 = arith.constant 1.000000e+00 : f32
    %18 = vector.broadcast %cst_11 : f32 to vector<128x128xf32>
    %19 = arith.addf %18, %17 : vector<128x128xf32>
    %20 = tpu.reciprocal %19 {approx = true} : vector<128x128xf32> -> vector<128x128xf32>
    %21 = arith.mulf %14, %20 : vector<128x128xf32>
    %c0_12 = arith.constant 0 : index
    %c0_13 = arith.constant 0 : index
    %22 = vector.load %arg12[%c0_12, %c0_13] : memref<128x128xf32, #tpu.memory_space<vmem>>, vector<128x128xf32>
    %23 = arith.truncf %21 : vector<128x128xf32> to vector<128x128xbf16>
    %c0_14 = arith.constant 0 : index
    %c0_15 = arith.constant 0 : index
    %24 = vector.load %arg7[%c0_14, %c0_15] : memref<128x128xbf16, #tpu.memory_space<vmem>>, vector<128x128xbf16>
    %cst_16 = arith.constant dense<0.000000e+00> : vector<128x128xf32>
    %25 = tpu.matmul %23, %24, %cst_16 {dimension_numbers = #tpu.dot_dimension_numbers<[1], [0], [0], [1], [0, 0, 1, 1], [], []>} : vector<128x128xbf16>, vector<128x128xbf16>, vector<128x128xf32> -> vector<128x128xf32>
    %26 = arith.addf %22, %25 : vector<128x128xf32>
    %c0_17 = arith.constant 0 : index
    %c0_18 = arith.constant 0 : index
    %27 = vector.load %arg12[%c0_17, %c0_18] : memref<128x128xf32, #tpu.memory_space<vmem>>, vector<128x128xf32>
    tpu.vector_store %arg12[%c0_17, %c0_18], %26 {strides = array<i32>} : memref<128x128xf32, #tpu.memory_space<vmem>>, vector<128x128xf32>,
    %c0_i32_19 = arith.constant 0 : i32
    %28 = arith.cmpi eq, %arg1, %c0_i32_19 : i32
    %29 = arith.extui %28 : i1 to i32
    %c0_i32_20 = arith.constant 0 : i32
    %30 = arith.cmpi ne, %29, %c0_i32_20 : i32
    scf.if %30 {
      %c0_21 = arith.constant 0 : index
      %c0_22 = arith.constant 0 : index
      %31 = vector.load %arg12[%c0_21, %c0_22] : memref<128x128xf32, #tpu.memory_space<vmem>>, vector<128x128xf32>
      %c0_23 = arith.constant 0 : index
      %c0_24 = arith.constant 0 : index
      %32 = vector.load %arg8[%c0_23, %c0_24] : memref<1x128xf32, #tpu.memory_space<vmem>>, vector<1x128xf32>
      %33 = vector.broadcast %32 : vector<1x128xf32> to vector<128x128xf32>
      %34 = arith.addf %31, %33 : vector<128x128xf32>
      %cst_25 = arith.constant 0.000000e+00 : f32
      %35 = vector.broadcast %cst_25 : f32 to vector<128x128xf32>
      %36 = arith.subf %35, %34 : vector<128x128xf32>
      %37 = math.exp %36 : vector<128x128xf32>
      %cst_26 = arith.constant 1.000000e+00 : f32
      %38 = vector.broadcast %cst_26 : f32 to vector<128x128xf32>
      %39 = arith.addf %38, %37 : vector<128x128xf32>
      %40 = tpu.reciprocal %39 {approx = true} : vector<128x128xf32> -> vector<128x128xf32>
      %41 = arith.mulf %34, %40 : vector<128x128xf32>
      %42 = arith.truncf %41 : vector<128x128xf32> to vector<128x128xbf16>
      %c0_27 = arith.constant 0 : index
      %c0_28 = arith.constant 0 : index
      %43 = vector.load %arg9[%c0_27, %c0_28] : memref<128x128xbf16, #tpu.memory_space<vmem>>, vector<128x128xbf16>
      %cst_29 = arith.constant dense<0.000000e+00> : vector<128x128xf32>
      %44 = tpu.matmul %42, %43, %cst_29 {dimension_numbers = #tpu.dot_dimension_numbers<[1], [0], [0], [1], [0, 0, 1, 1], [], []>} : vector<128x128xbf16>, vector<128x128xbf16>, vector<128x128xf32> -> vector<128x128xf32>
      %c0_30 = arith.constant 0 : index
      %c0_31 = arith.constant 0 : index
      %45 = vector.load %arg10[%c0_30, %c0_31] : memref<1x128xf32, #tpu.memory_space<vmem>>, vector<1x128xf32>
      %46 = vector.broadcast %45 : vector<1x128xf32> to vector<128x128xf32>
      %47 = arith.addf %44, %46 : vector<128x128xf32>
      %c0_32 = arith.constant 0 : index
      %c0_33 = arith.constant 0 : index
      %48 = vector.load %arg11[%c0_32, %c0_33] : memref<128x128xf32, #tpu.memory_space<vmem>>, vector<128x128xf32>
      tpu.vector_store %arg11[%c0_32, %c0_33], %47 {strides = array<i32>} : memref<128x128xf32, #tpu.memory_space<vmem>>, vector<128x128xf32>,
    } else {
    }
    return
  }
  func.func @transform_0(%arg0: i32, %arg1: i32) -> (i32, i32) {
    %c0_i32 = arith.constant 0 : i32
    %c0_i32_0 = arith.constant 0 : i32
    %c0_i32_1 = arith.constant 0 : i32
    return %c0_i32, %c0_i32_0 : i32, i32
  }
  func.func @transform_1(%arg0: i32, %arg1: i32) -> (i32, i32) {
    %c0_i32 = arith.constant 0 : i32
    %c0_i32_0 = arith.constant 0 : i32
    return %arg0, %c0_i32 : i32, i32
  }
  func.func @transform_2(%arg0: i32, %arg1: i32) -> (i32, i32) {
    %c0_i32 = arith.constant 0 : i32
    %c0_i32_0 = arith.constant 0 : i32
    return %c0_i32, %arg1 : i32, i32
  }
  func.func @transform_3(%arg0: i32, %arg1: i32) -> (i32, i32) {
    %c0_i32 = arith.constant 0 : i32
    %c0_i32_0 = arith.constant 0 : i32
    return %c0_i32, %arg1 : i32, i32
  }
  func.func @transform_4(%arg0: i32, %arg1: i32) -> (i32, i32) {
    %c0_i32 = arith.constant 0 : i32
    %c0_i32_0 = arith.constant 0 : i32
    return %c0_i32, %arg1 : i32, i32
  }
  func.func @transform_5(%arg0: i32, %arg1: i32) -> (i32, i32) {
    %c0_i32 = arith.constant 0 : i32
    %c0_i32_0 = arith.constant 0 : i32
    return %arg1, %c0_i32 : i32, i32
  }
  func.func @transform_6(%arg0: i32, %arg1: i32) -> (i32, i32) {
    %c0_i32 = arith.constant 0 : i32
    %c0_i32_0 = arith.constant 0 : i32
    %c0_i32_1 = arith.constant 0 : i32
    return %c0_i32, %c0_i32_0 : i32, i32
  }
  func.func @transform_7(%arg0: i32, %arg1: i32) -> (i32, i32) {
    %c0_i32 = arith.constant 0 : i32
    %c0_i32_0 = arith.constant 0 : i32
    %c0_i32_1 = arith.constant 0 : i32
    return %c0_i32, %c0_i32_0 : i32, i32
  }
  func.func @transform_8(%arg0: i32, %arg1: i32) -> (i32, i32) {
    %c0_i32 = arith.constant 0 : i32
    %c0_i32_0 = arith.constant 0 : i32
    %c0_i32_1 = arith.constant 0 : i32
    return %c0_i32, %c0_i32_0 : i32, i32
  }
  func.func @transform_9(%arg0: i32, %arg1: i32) -> (i32, i32) {
    %c0_i32 = arith.constant 0 : i32
    %c0_i32_0 = arith.constant 0 : i32
    return %arg0, %c0_i32 : i32, i32
  }
}

</mosaic_0001>

<llo_original>
// kernel: flow_model_wrapper_forward.1
$region0: #{flow_model_wrapper_forward.1}
  #allocation0 [shape = 'u32[]', space=smem, size = 0x4, offset = 0x4, fixed_abs, tag = 'smem constant byte address 0x4 - core index']
  #allocation1 [shape = 'u32[72,128]{1,0:T(1,128)}', space=vmem, size = 0x9000, scoped, tag = 'internal scratch']
  #allocation2 [shape = 'f32[128,128]{1,0:T(8,128)}', space=vmem, size = 0x10000, scoped, tag = 'scratch operand']
  #allocation3 [shape = 'f32[1,1]{1,0:T(1,128)S(6)}', space=smem, size = 0x200, scoped, tag = 'scoped memory for flow_model_wrapper_forward.1']
  %s0 = inlined_call_operand.<no memory space> [shape: f32[1,1], index: 0, kind: input, shape index: {}]
  %s1 = inlined_call_operand.vmem [shape: f32[256,128], index: 1, kind: input, shape index: {}]
  %s2 = inlined_call_operand.vmem [shape: bf16[128,128], index: 2, kind: input, shape index: {}]
  %s3 = inlined_call_operand.vmem [shape: f32[1,128], index: 3, kind: input, shape index: {}]
  %s4 = inlined_call_operand.vmem [shape: f32[1,128], index: 4, kind: input, shape index: {}]
  %s5 = inlined_call_operand.vmem [shape: bf16[128,128], index: 5, kind: input, shape index: {}]
  %s6 = inlined_call_operand.vmem [shape: f32[1,128], index: 6, kind: input, shape index: {}]
  %s7 = inlined_call_operand.vmem [shape: bf16[128,128], index: 7, kind: input, shape index: {}]
  %s8 = inlined_call_operand.vmem [shape: f32[1,128], index: 8, kind: input, shape index: {}]
  %s9 = inlined_call_operand.vmem [shape: f32[256,128], index: 9, kind: output, shape index: {}]
  %s10 = sld [smem:[#allocation0]]
  $region77: #{flow_model_wrapper_forward.1} parent=0
    _
  %s12 = ssub.s32 1, %s10
  %s13 = scalar_select 0, %s12, %s10
  %14 = sst [smem:[#allocation3]] %s0
  loop: start=0, step=1, limit=4
  $region2: #{flow_model_wrapper_forward.1} parent=0 // loop_pre_header
    _
  $region3: #{flow_model_wrapper_forward.1} parent=0 // loop_header
    %s16 = sphi 0, %s20
    %p17 = scmp.ge.s32.totalorder %s16, 4
    %s23 = sphi 0, %s35
    %s24 = sphi 0, %s31
    %s25 = sphi 0, %s23
    %s26 = sphi 0, %s24
    %s27 = sphi 0, %s25
    %s28 = sphi 0, %s26
    %s36 = sphi 0, %s36
    %s38 = sphi 0, %s36
    %s39 = sphi 0, %s38
    %s53 = sphi 0, %s39
    %s59 = sphi 0, %s61
    %s62 = sphi 0, %s59
    %s63 = sphi 0, %s62
    %s79 = sphi 0, %s63
    %s85 = sphi 0, %s87
    %s88 = sphi 0, %s85
    %s89 = sphi 0, %s88
    %s105 = sphi 0, %s89
    %s111 = sphi 0, %s113
    %s114 = sphi 0, %s111
    %s115 = sphi 0, %s114
    %s131 = sphi 0, %s115
    %s137 = sphi 0, %s139
    %s140 = sphi 0, %s137
    %s141 = sphi 0, %s140
    %s157 = sphi 0, %s141
    %s163 = sphi 0, %s165
    %s166 = sphi 0, %s163
    %s167 = sphi 0, %s166
    %s183 = sphi 0, %s167
    %s187 = sphi 0, %s187
    %s189 = sphi 0, %s187
    %s190 = sphi 0, %s189
    %s204 = sphi 0, %s190
    %s208 = sphi 0, %s208
    %s210 = sphi 0, %s208
    %s211 = sphi 0, %s210
    %s225 = sphi 0, %s211
    %s229 = sphi 0, %s229
    %s231 = sphi 0, %s229
    %s232 = sphi 0, %s231
    %s246 = sphi 0, %s232
    %s252 = sphi 0, %s254
    %s255 = sphi 0, %s252
    %s256 = sphi 0, %s255
    %s272 = sphi 0, %s256
  $region4: #{flow_model_wrapper_forward.1} parent=0 // loop_header_branch
    %19 = sbr.rel (%p17) target = $region8
  $region5: #{flow_model_wrapper_forward.1} parent=0 // loop_body
    %s21 = ssub.s32 %s16, 1
    %s22 = ssub.s32 %s16, 2
    %s29 = sadd.s32 1, %s24
    %p30 = scmp.ge.s32.totalorder %s29, 1
    %s31 = scalar_select %p30, 0, %s29
    %s32 = sadd.s32 1, %s23
    %s33 = scalar_select %p30, %s32, %s23
    %p34 = scmp.ge.s32.totalorder %s33, 2
    %s35 = scalar_select %p34, 0, %s33
    %s37 = sadd.s32 %s36, 1
    %p40 = scmp.eq.s32.totalorder %s16, 1
    %p41 = scmp.ne.s32.totalorder %s36, %s38
    %p42 = scmp.eq.s32.totalorder %s16, 0
    %p43 = por %p41, %p42
    %p44 = scmp.ne.s32.totalorder %s36, %s38
    %p45 = scmp.eq.s32.totalorder %s21, 1
    %p46 = por %p44, %p45
    %p47 = scmp.ne.s32.totalorder %s38, %s39
    %p48 = scmp.eq.s32.totalorder %s21, 0
    %p49 = por %p47, %p48
    %p50 = scmp.ne.s32.totalorder %s38, %s39
    %p51 = scmp.eq.s32.totalorder %s22, 1
    %p52 = por %p50, %p51
    %p54 = scmp.ne.s32.totalorder %s39, %s53
    %p55 = scmp.eq.s32.totalorder %s22, 0
    %p56 = por %p54, %p55
    %s57 = ssub.s32 %s23, %s35
    %p58 = scmp.eq.s32.totalorder %s57, 0
    %s60 = sadd.s32 %s59, 1
    %s61 = scalar_select %p58, %s59, %s60
    %p64 = pneg %p58
    %p65 = scmp.eq.s32.totalorder %s16, 1
    %p66 = por %p64, %p65
    %p67 = scmp.ne.s32.totalorder %s59, %s62
    %p68 = scmp.eq.s32.totalorder %s16, 0
    %p69 = por %p67, %p68
    %p70 = scmp.ne.s32.totalorder %s59, %s62
    %p71 = scmp.eq.s32.totalorder %s21, 1
    %p72 = por %p70, %p71
    %p73 = scmp.ne.s32.totalorder %s62, %s63
    %p74 = scmp.eq.s32.totalorder %s21, 0
    %p75 = por %p73, %p74
    %p76 = scmp.ne.s32.totalorder %s62, %s63
    %p77 = scmp.eq.s32.totalorder %s22, 1
    %p78 = por %p76, %p77
    %p80 = scmp.ne.s32.totalorder %s63, %s79
    %p81 = scmp.eq.s32.totalorder %s22, 0
    %p82 = por %p80, %p81
    %s83 = ssub.s32 %s24, %s31
    %p84 = scmp.eq.s32.totalorder %s83, 0
    %s86 = sadd.s32 %s85, 1
    %s87 = scalar_select %p84, %s85, %s86
    %p90 = pneg %p84
    %p91 = scmp.eq.s32.totalorder %s16, 1
    %p92 = por %p90, %p91
    %p93 = scmp.ne.s32.totalorder %s85, %s88
    %p94 = scmp.eq.s32.totalorder %s16, 0
    %p95 = por %p93, %p94
    %p96 = scmp.ne.s32.totalorder %s85, %s88
    %p97 = scmp.eq.s32.totalorder %s21, 1
    %p98 = por %p96, %p97
    %p99 = scmp.ne.s32.totalorder %s88, %s89
    %p100 = scmp.eq.s32.totalorder %s21, 0
    %p101 = por %p99, %p100
    %p102 = scmp.ne.s32.totalorder %s88, %s89
    %p103 = scmp.eq.s32.totalorder %s22, 1
    %p104 = por %p102, %p103
    %p106 = scmp.ne.s32.totalorder %s89, %s105
    %p107 = scmp.eq.s32.totalorder %s22, 0
    %p108 = por %p106, %p107
    %s109 = ssub.s32 %s24, %s31
    %p110 = scmp.eq.s32.totalorder %s109, 0
    %s112 = sadd.s32 %s111, 1
    %s113 = scalar_select %p110, %s111, %s112
    %p116 = pneg %p110
    %p117 = scmp.eq.s32.totalorder %s16, 1
    %p118 = por %p116, %p117
    %p119 = scmp.ne.s32.totalorder %s111, %s114
    %p120 = scmp.eq.s32.totalorder %s16, 0
    %p121 = por %p119, %p120
    %p122 = scmp.ne.s32.totalorder %s111, %s114
    %p123 = scmp.eq.s32.totalorder %s21, 1
    %p124 = por %p122, %p123
    %p125 = scmp.ne.s32.totalorder %s114, %s115
    %p126 = scmp.eq.s32.totalorder %s21, 0
    %p127 = por %p125, %p126
    %p128 = scmp.ne.s32.totalorder %s114, %s115
    %p129 = scmp.eq.s32.totalorder %s22, 1
    %p130 = por %p128, %p129
    %p132 = scmp.ne.s32.totalorder %s115, %s131
    %p133 = scmp.eq.s32.totalorder %s22, 0
    %p134 = por %p132, %p133
    %s135 = ssub.s32 %s24, %s31
    %p136 = scmp.eq.s32.totalorder %s135, 0
    %s138 = sadd.s32 %s137, 1
    %s139 = scalar_select %p136, %s137, %s138
    %p142 = pneg %p136
    %p143 = scmp.eq.s32.totalorder %s16, 1
    %p144 = por %p142, %p143
    %p145 = scmp.ne.s32.totalorder %s137, %s140
    %p146 = scmp.eq.s32.totalorder %s16, 0
    %p147 = por %p145, %p146
    %p148 = scmp.ne.s32.totalorder %s137, %s140
    %p149 = scmp.eq.s32.totalorder %s21, 1
    %p150 = por %p148, %p149
    %p151 = scmp.ne.s32.totalorder %s140, %s141
    %p152 = scmp.eq.s32.totalorder %s21, 0
    %p153 = por %p151, %p152
    %p154 = scmp.ne.s32.totalorder %s140, %s141
    %p155 = scmp.eq.s32.totalorder %s22, 1
    %p156 = por %p154, %p155
    %p158 = scmp.ne.s32.totalorder %s141, %s157
    %p159 = scmp.eq.s32.totalorder %s22, 0
    %p160 = por %p158, %p159
    %s161 = ssub.s32 %s24, %s31
    %p162 = scmp.eq.s32.totalorder %s161, 0
    %s164 = sadd.s32 %s163, 1
    %s165 = scalar_select %p162, %s163, %s164
    %p168 = pneg %p162
    %p169 = scmp.eq.s32.totalorder %s16, 1
    %p170 = por %p168, %p169
    %p171 = scmp.ne.s32.totalorder %s163, %s166
    %p172 = scmp.eq.s32.totalorder %s16, 0
    %p173 = por %p171, %p172
    %p174 = scmp.ne.s32.totalorder %s163, %s166
    %p175 = scmp.eq.s32.totalorder %s21, 1
    %p176 = por %p174, %p175
    %p177 = scmp.ne.s32.totalorder %s166, %s167
    %p178 = scmp.eq.s32.totalorder %s21, 0
    %p179 = por %p177, %p178
    %p180 = scmp.ne.s32.totalorder %s166, %s167
    %p181 = scmp.eq.s32.totalorder %s22, 1
    %p182 = por %p180, %p181
    %p184 = scmp.ne.s32.totalorder %s167, %s183
    %p185 = scmp.eq.s32.totalorder %s22, 0
    %p186 = por %p184, %p185
    %s188 = sadd.s32 %s187, 1
    %p191 = scmp.eq.s32.totalorder %s16, 1
    %p192 = scmp.ne.s32.totalorder %s187, %s189
    %p193 = scmp.eq.s32.totalorder %s16, 0
    %p194 = por %p192, %p193
    %p195 = scmp.ne.s32.totalorder %s187, %s189
    %p196 = scmp.eq.s32.totalorder %s21, 1
    %p197 = por %p195, %p196
    %p198 = scmp.ne.s32.totalorder %s189, %s190
    %p199 = scmp.eq.s32.totalorder %s21, 0
    %p200 = por %p198, %p199
    %p201 = scmp.ne.s32.totalorder %s189, %s190
    %p202 = scmp.eq.s32.totalorder %s22, 1
    %p203 = por %p201, %p202
    %p205 = scmp.ne.s32.totalorder %s190, %s204
    %p206 = scmp.eq.s32.totalorder %s22, 0
    %p207 = por %p205, %p206
    %s209 = sadd.s32 %s208, 1
    %p212 = scmp.eq.s32.totalorder %s16, 1
    %p213 = scmp.ne.s32.totalorder %s208, %s210
    %p214 = scmp.eq.s32.totalorder %s16, 0
    %p215 = por %p213, %p214
    %p216 = scmp.ne.s32.totalorder %s208, %s210
    %p217 = scmp.eq.s32.totalorder %s21, 1
    %p218 = por %p216, %p217
    %p219 = scmp.ne.s32.totalorder %s210, %s211
    %p220 = scmp.eq.s32.totalorder %s21, 0
    %p221 = por %p219, %p220
    %p222 = scmp.ne.s32.totalorder %s210, %s211
    %p223 = scmp.eq.s32.totalorder %s22, 1
    %p224 = por %p222, %p223
    %p226 = scmp.ne.s32.totalorder %s211, %s225
    %p227 = scmp.eq.s32.totalorder %s22, 0
    %p228 = por %p226, %p227
    %s230 = sadd.s32 %s229, 1
    %p233 = scmp.eq.s32.totalorder %s16, 1
    %p234 = scmp.ne.s32.totalorder %s229, %s231
    %p235 = scmp.eq.s32.totalorder %s16, 0
    %p236 = por %p234, %p235
    %p237 = scmp.ne.s32.totalorder %s229, %s231
    %p238 = scmp.eq.s32.totalorder %s21, 1
    %p239 = por %p237, %p238
    %p240 = scmp.ne.s32.totalorder %s231, %s232
    %p241 = scmp.eq.s32.totalorder %s21, 0
    %p242 = por %p240, %p241
    %p243 = scmp.ne.s32.totalorder %s231, %s232
    %p244 = scmp.eq.s32.totalorder %s22, 1
    %p245 = por %p243, %p244
    %p247 = scmp.ne.s32.totalorder %s232, %s246
    %p248 = scmp.eq.s32.totalorder %s22, 0
    %p249 = por %p247, %p248
    %s250 = ssub.s32 %s23, %s35
    %p251 = scmp.eq.s32.totalorder %s250, 0
    %s253 = sadd.s32 %s252, 1
    %s254 = scalar_select %p251, %s252, %s253
    %p257 = pneg %p251
    %p258 = scmp.eq.s32.totalorder %s16, 1
    %p259 = por %p257, %p258
    %p260 = scmp.ne.s32.totalorder %s252, %s255
    %p261 = scmp.eq.s32.totalorder %s16, 0
    %p262 = por %p260, %p261
    %p263 = scmp.ne.s32.totalorder %s252, %s255
    %p264 = scmp.eq.s32.totalorder %s21, 1
    %p265 = por %p263, %p264
    %p266 = scmp.ne.s32.totalorder %s255, %s256
    %p267 = scmp.eq.s32.totalorder %s21, 0
    %p268 = por %p266, %p267
    %p269 = scmp.ne.s32.totalorder %s255, %s256
    %p270 = scmp.eq.s32.totalorder %s22, 1
    %p271 = por %p269, %p270
    %p273 = scmp.ne.s32.totalorder %s256, %s272
    %p274 = scmp.eq.s32.totalorder %s22, 0
    %p275 = por %p273, %p274
    %p276 = scmp.le.s32.totalorder 1, %s16
    %p277 = scmp.lt.s32.totalorder %s16, 3
    %p278 = pnand %p276, %p277
    %p279 = pneg %p278
    // Predicated region
    $region9: #{flow_model_wrapper_forward.1} parent=5 // pred_check
      _
    $region10: #{flow_model_wrapper_forward.1} parent=5 // pred_check_branch
      %281 = sbr.rel (%p278) target = $region12
    $region11: #{flow_model_wrapper_forward.1} parent=5 // pred_region
      %s282 = ssub.s32 %s16, 1
      // Predicated region
      $region13: #{flow_model_wrapper_forward.1} parent=11 // pred_check
        %p283 = pneg %p49
      $region14: #{flow_model_wrapper_forward.1} parent=11 // pred_check_branch
        %285 = sbr.rel (%p283) target = $region16
      $region15: #{flow_model_wrapper_forward.1} parent=11 // pred_region
        _
      $region16: #{flow_model_wrapper_forward.1} parent=11 // pred_fallthru
        _
      // Predicated region
      $region17: #{flow_model_wrapper_forward.1} parent=11 // pred_check
        %p286 = pneg %p101
      $region18: #{flow_model_wrapper_forward.1} parent=11 // pred_check_branch
        %288 = sbr.rel (%p286) target = $region20
      $region19: #{flow_model_wrapper_forward.1} parent=11 // pred_region
        %p289 = scmp.lt.s32.totalorder %s26, 0
        %s290 = scalar_select %p289, %s26, 0
        %s291 = smul.addr %s290, 4
        %s292 = scalar_lea.vmem %s2, %s291
      $region20: #{flow_model_wrapper_forward.1} parent=11 // pred_fallthru
        _
      // Predicated region
      $region21: #{flow_model_wrapper_forward.1} parent=11 // pred_check
        %p293 = pneg %p127
      $region22: #{flow_model_wrapper_forward.1} parent=11 // pred_check_branch
        %295 = sbr.rel (%p293) target = $region24
      $region23: #{flow_model_wrapper_forward.1} parent=11 // pred_region
        %p296 = scmp.lt.s32.totalorder %s26, 0
        %s297 = scalar_select %p296, %s26, 0
        %s298 = scalar_lea.vmem %s3, %s297
      $region24: #{flow_model_wrapper_forward.1} parent=11 // pred_fallthru
        _
      // Predicated region
      $region25: #{flow_model_wrapper_forward.1} parent=11 // pred_check
        %p299 = pneg %p153
      $region26: #{flow_model_wrapper_forward.1} parent=11 // pred_check_branch
        %301 = sbr.rel (%p299) target = $region28
      $region27: #{flow_model_wrapper_forward.1} parent=11 // pred_region
        %p302 = scmp.lt.s32.totalorder %s26, 0
        %s303 = scalar_select %p302, %s26, 0
        %s304 = scalar_lea.vmem %s4, %s303
      $region28: #{flow_model_wrapper_forward.1} parent=11 // pred_fallthru
        _
      // Predicated region
      $region29: #{flow_model_wrapper_forward.1} parent=11 // pred_check
        %p305 = pneg %p179
      $region30: #{flow_model_wrapper_forward.1} parent=11 // pred_check_branch
        %307 = sbr.rel (%p305) target = $region32
      $region31: #{flow_model_wrapper_forward.1} parent=11 // pred_region
        %s308 = smul.u32 16, %s26
        %p309 = scmp.lt.s32.totalorder %s308, 15
        %s310 = scalar_select %p309, %s308, 15
        %s311 = smul.addr %s310, 4
        %s312 = scalar_lea.vmem %s5, %s311
        %s313 = smul.u32 16, %s26
      $region32: #{flow_model_wrapper_forward.1} parent=11 // pred_fallthru
        _
      // Predicated region
      $region33: #{flow_model_wrapper_forward.1} parent=11 // pred_check
        %p314 = pneg %p200
      $region34: #{flow_model_wrapper_forward.1} parent=11 // pred_check_branch
        %316 = sbr.rel (%p314) target = $region36
      $region35: #{flow_model_wrapper_forward.1} parent=11 // pred_region
        _
      $region36: #{flow_model_wrapper_forward.1} parent=11 // pred_fallthru
        _
      // Predicated region
      $region37: #{flow_model_wrapper_forward.1} parent=11 // pred_check
        %p317 = pneg %p221
      $region38: #{flow_model_wrapper_forward.1} parent=11 // pred_check_branch
        %319 = sbr.rel (%p317) target = $region40
      $region39: #{flow_model_wrapper_forward.1} parent=11 // pred_region
        _
      $region40: #{flow_model_wrapper_forward.1} parent=11 // pred_fallthru
        _
      // Predicated region
      $region41: #{flow_model_wrapper_forward.1} parent=11 // pred_check
        %p320 = pneg %p242
      $region42: #{flow_model_wrapper_forward.1} parent=11 // pred_check_branch
        %322 = sbr.rel (%p320) target = $region44
      $region43: #{flow_model_wrapper_forward.1} parent=11 // pred_region
        _
      $region44: #{flow_model_wrapper_forward.1} parent=11 // pred_fallthru
        _
    $region12: #{flow_model_wrapper_forward.1} parent=5 // pred_fallthru
      _
    %p323 = scmp.lt.s32.totalorder %s16, 2
    // Predicated region
    $region45: #{flow_model_wrapper_forward.1} parent=5 // pred_check
      %p324 = pneg %p323
    $region46: #{flow_model_wrapper_forward.1} parent=5 // pred_check_branch
      %326 = sbr.rel (%p324) target = $region48
    $region47: #{flow_model_wrapper_forward.1} parent=5 // pred_region
      // Predicated region
      $region49: #{flow_model_wrapper_forward.1} parent=47 // pred_check
        %p327 = pneg %p69
      $region50: #{flow_model_wrapper_forward.1} parent=47 // pred_check_branch
        %329 = sbr.rel (%p327) target = $region52
      $region51: #{flow_model_wrapper_forward.1} parent=47 // pred_region
        %s330 = smul.u32 16, %s23
        %p331 = scmp.lt.s32.totalorder %s330, 31
        %s332 = scalar_select %p331, %s330, 31
        %s333 = smul.addr %s332, 8
        %s334 = scalar_lea.vmem %s1, %s333
        %s335 = smul.u32 16, %s23
      $region52: #{flow_model_wrapper_forward.1} parent=47 // pred_fallthru
        _
    $region48: #{flow_model_wrapper_forward.1} parent=5 // pred_fallthru
      _
    %p336 = scmp.le.s32.totalorder 1, %s16
    %p337 = scmp.lt.s32.totalorder %s16, 3
    %p338 = pnand %p336, %p337
    %p339 = pneg %p338
    // Predicated region
    $region53: #{flow_model_wrapper_forward.1} parent=5 // pred_check
      _
    $region54: #{flow_model_wrapper_forward.1} parent=5 // pred_check_branch
      %341 = sbr.rel (%p338) target = $region56
    $region55: #{flow_model_wrapper_forward.1} parent=5 // pred_region
      %s342 = ssub.s32 %s16, 1
      %p343 = pneg %p49
      %p344 = pneg %p46
      %s345 = smul.u32 16, %s25
      %p346 = scmp.lt.s32.totalorder %s345, 31
      %s347 = scalar_select %p346, %s345, 31
      %s348 = smul.addr %s347, 8
      %s349 = scalar_lea.vmem %s1, %s348
      %p350 = pneg %p75
      %p351 = pneg %p72
      %p352 = scmp.lt.s32.totalorder %s26, 0
      %s353 = scalar_select %p352, %s26, 0
      %s354 = smul.addr %s353, 4
      %s355 = scalar_lea.vmem %s2, %s354
      %p356 = pneg %p101
      %p357 = pneg %p98
      %p358 = scmp.lt.s32.totalorder %s26, 0
      %s359 = scalar_select %p358, %s26, 0
      %s360 = scalar_lea.vmem %s3, %s359
      %p361 = pneg %p127
      %p362 = pneg %p124
      %p363 = scmp.lt.s32.totalorder %s26, 0
      %s364 = scalar_select %p363, %s26, 0
      %s365 = scalar_lea.vmem %s4, %s364
      %p366 = pneg %p153
      %p367 = pneg %p150
      %s368 = smul.u32 16, %s26
      %p369 = scmp.lt.s32.totalorder %s368, 15
      %s370 = scalar_select %p369, %s368, 15
      %s371 = smul.addr %s370, 4
      %s372 = scalar_lea.vmem %s5, %s371
      %p373 = pneg %p179
      %p374 = pneg %p176
      %p375 = pneg %p200
      %p376 = pneg %p197
      %p377 = pneg %p221
      %p378 = pneg %p218
      %p379 = pneg %p242
      %p380 = pneg %p239
      %p381 = pneg %p268
      %p382 = pneg %p265
      %s383 = smul.u32 16, %s25
      %p384 = scmp.lt.s32.totalorder %s383, 31
      %s385 = scalar_select %p384, %s383, 31
      %s386 = smul.addr %s385, 8
      %s387 = scalar_lea.vmem %s9, %s386
      %s388 = smul.u32 16, %s25
      %p389 = scmp.lt.s32.totalorder %s388, 31
      %s390 = scalar_select %p389, %s388, 31
      %s391 = smul.addr %s390, 8
      %s392 = scalar_lea.vmem %s1, %s391
      %s393 = smul.u32 16, %s25
      %p394 = scmp.lt.s32.totalorder %s26, 0
      %s395 = scalar_select %p394, %s26, 0
      %s396 = smul.addr %s395, 4
      %s397 = scalar_lea.vmem %s2, %s396
      %p398 = scmp.lt.s32.totalorder %s26, 0
      %s399 = scalar_select %p398, %s26, 0
      %s400 = scalar_lea.vmem %s3, %s399
      %p401 = scmp.lt.s32.totalorder %s26, 0
      %s402 = scalar_select %p401, %s26, 0
      %s403 = scalar_lea.vmem %s4, %s402
      %s404 = smul.u32 16, %s26
      %p405 = scmp.lt.s32.totalorder %s404, 15
      %s406 = scalar_select %p405, %s404, 15
      %s407 = smul.addr %s406, 4
      %s408 = scalar_lea.vmem %s5, %s407
      %s409 = smul.u32 16, %s26
      %s410 = smul.u32 16, %s25
      %p411 = scmp.lt.s32.totalorder %s410, 31
      %s412 = scalar_select %p411, %s410, 31
      %s413 = smul.addr %s412, 8
      %s414 = scalar_lea.vmem %s9, %s413
      %s415 = smul.u32 16, %s25
      %p416 = scmp.eq.s32.totalorder %s26, 0
      // Predicated region
      $region57: #{flow_model_wrapper_forward.1} parent=55 // pred_check
        %p417 = pneg %p416
      $region58: #{flow_model_wrapper_forward.1} parent=55 // pred_check_branch
        %419 = sbr.rel (%p417) target = $region60
      $region59: #{flow_model_wrapper_forward.1} parent=55 // pred_region
        %420 = vst [vmem:[#allocation2] sm:$0xff] 0.0
        %421 = vst [vmem:[#allocation2 + $0x8] sm:$0xff] 0.0
        %422 = vst [vmem:[#allocation2 + $0x10] sm:$0xff] 0.0
        %423 = vst [vmem:[#allocation2 + $0x18] sm:$0xff] 0.0
        %424 = vst [vmem:[#allocation2 + $0x20] sm:$0xff] 0.0
        %425 = vst [vmem:[#allocation2 + $0x28] sm:$0xff] 0.0
        %426 = vst [vmem:[#allocation2 + $0x30] sm:$0xff] 0.0
        %427 = vst [vmem:[#allocation2 + $0x38] sm:$0xff] 0.0
        %428 = vst [vmem:[#allocation2 + $0x40] sm:$0xff] 0.0
        %429 = vst [vmem:[#allocation2 + $0x48] sm:$0xff] 0.0
        %430 = vst [vmem:[#allocation2 + $0x50] sm:$0xff] 0.0
        %431 = vst [vmem:[#allocation2 + $0x58] sm:$0xff] 0.0
        %432 = vst [vmem:[#allocation2 + $0x60] sm:$0xff] 0.0
        %433 = vst [vmem:[#allocation2 + $0x68] sm:$0xff] 0.0
        %434 = vst [vmem:[#allocation2 + $0x70] sm:$0xff] 0.0
        %435 = vst [vmem:[#allocation2 + $0x78] sm:$0xff] 0.0
      $region60: #{flow_model_wrapper_forward.1} parent=55 // pred_fallthru
        _
      %s436 = sld [smem:[#allocation3]]
      %v437 = vld [vmem:[%s392] sm:$0xff]
      %v438 = vld [vmem:[%s392 + $0x8] sm:$0xff]
      %v439 = vld [vmem:[%s392 + $0x10] sm:$0xff]
      %v440 = vld [vmem:[%s392 + $0x18] sm:$0xff]
      %v441 = vld [vmem:[%s392 + $0x20] sm:$0xff]
      %v442 = vld [vmem:[%s392 + $0x28] sm:$0xff]
      %v443 = vld [vmem:[%s392 + $0x30] sm:$0xff]
      %v444 = vld [vmem:[%s392 + $0x38] sm:$0xff]
      %v445 = vld [vmem:[%s392 + $0x40] sm:$0xff]
      %v446 = vld [vmem:[%s392 + $0x48] sm:$0xff]
      %v447 = vld [vmem:[%s392 + $0x50] sm:$0xff]
      %v448 = vld [vmem:[%s392 + $0x58] sm:$0xff]
      %v449 = vld [vmem:[%s392 + $0x60] sm:$0xff]
      %v450 = vld [vmem:[%s392 + $0x68] sm:$0xff]
      %v451 = vld [vmem:[%s392 + $0x70] sm:$0xff]
      %v452 = vld [vmem:[%s392 + $0x78] sm:$0xff]
      %v453 = vpack.c.bf16 %v438, %v437
      %v454 = vpack.c.bf16 %v440, %v439
      %v455 = vpack.c.bf16 %v442, %v441
      %v456 = vpack.c.bf16 %v444, %v443
      %v457 = vpack.c.bf16 %v446, %v445
      %v458 = vpack.c.bf16 %v448, %v447
      %v459 = vpack.c.bf16 %v450, %v449
      %v460 = vpack.c.bf16 %v452, %v451
      %v461 = vld [vmem:[%s397] sm:$0xf]
      %v462 = vld [vmem:[%s397 + $0x4] sm:$0xf]
      %v463 = vld [vmem:[%s397 + $0x8] sm:$0xf]
      %v464 = vld [vmem:[%s397 + $0xc] sm:$0xf]
      %v465 = vld [vmem:[%s397 + $0x10] sm:$0xf]
      %v466 = vld [vmem:[%s397 + $0x14] sm:$0xf]
      %v467 = vld [vmem:[%s397 + $0x18] sm:$0xf]
      %v468 = vld [vmem:[%s397 + $0x1c] sm:$0xf]
      %v469 = vld [vmem:[%s397 + $0x20] sm:$0xf]
      %v470 = vld [vmem:[%s397 + $0x24] sm:$0xf]
      %v471 = vld [vmem:[%s397 + $0x28] sm:$0xf]
      %v472 = vld [vmem:[%s397 + $0x2c] sm:$0xf]
      %v473 = vld [vmem:[%s397 + $0x30] sm:$0xf]
      %v474 = vld [vmem:[%s397 + $0x34] sm:$0xf]
      %v475 = vld [vmem:[%s397 + $0x38] sm:$0xf]
      %v476 = vld [vmem:[%s397 + $0x3c] sm:$0xf]
      %v477 = vld [vmem:[%s400] sm:$0x1]
      %v478 = vstv %s436
      %v479 = vmul.f32 %v478, %v477
      %v480 = vld [vmem:[%s403] sm:$0x1]
      %v481 = vadd.f32 %v479, %v480
      %v483 = vperm.slane %v481, 0
      %v501 = vunpack.c.l.b16 %v461
      %v502 = vunpack.c.l.b16 %v462
      %v503 = vunpack.c.l.b16 %v463
      %v504 = vunpack.c.l.b16 %v464
      %v505 = vunpack.c.l.b16 %v465
      %v506 = vunpack.c.l.b16 %v466
      %v507 = vunpack.c.l.b16 %v467
      %v508 = vunpack.c.l.b16 %v468
      %v509 = vunpack.c.l.b16 %v469
      %v510 = vunpack.c.l.b16 %v470
      %v511 = vunpack.c.l.b16 %v471
      %v512 = vunpack.c.l.b16 %v472
      %v513 = vunpack.c.l.b16 %v473
      %v514 = vunpack.c.l.b16 %v474
      %v515 = vunpack.c.l.b16 %v475
      %v516 = vunpack.c.l.b16 %v476
      %v517 = vpack.c.b16 %v502, %v501
      %v518 = vpack.c.b16 %v504, %v503
      %v519 = vpack.c.b16 %v506, %v505
      %v520 = vpack.c.b16 %v508, %v507
      %v521 = vpack.c.b16 %v510, %v509
      %v522 = vpack.c.b16 %v512, %v511
      %v523 = vpack.c.b16 %v514, %v513
      %v524 = vpack.c.b16 %v516, %v515
      %533 = vmatpush.bf16.msra.mxu0 %v524
      %534 = vmatpush.bf16.msra.mxu0 %v523
      %535 = vmatpush.bf16.msra.mxu0 %v522
      %536 = vmatpush.bf16.msra.mxu0 %v521
      %537 = vmatpush.bf16.msra.mxu0 %v520
      %538 = vmatpush.bf16.msra.mxu0 %v519
      %539 = vmatpush.bf16.msra.mxu0 %v518
      %540 = vmatpush.bf16.msra.mxu0 %v517
      %541 = vmatmul.bf16.gmra.mxu0 %v453
      %v542 = vpop.f32.mrf.mxu0
      %v543 = vadd.f32 %v483, %v542
      %v544 = vpop.f32.mrf.mxu0
      %v545 = vadd.f32 %v483, %v544
      %546 = vmatmul.bf16.gmra.mxu0 %v454
      %v547 = vpop.f32.mrf.mxu0
      %v548 = vadd.f32 %v483, %v547
      %v549 = vpop.f32.mrf.mxu0
      %v550 = vadd.f32 %v483, %v549
      %551 = vmatmul.bf16.gmra.mxu0 %v455
      %v552 = vpop.f32.mrf.mxu0
      %v553 = vadd.f32 %v483, %v552
      %v554 = vpop.f32.mrf.mxu0
      %v555 = vadd.f32 %v483, %v554
      %556 = vmatmul.bf16.gmra.mxu0 %v456
      %v557 = vpop.f32.mrf.mxu0
      %v558 = vadd.f32 %v483, %v557
      %v559 = vpop.f32.mrf.mxu0
      %v560 = vadd.f32 %v483, %v559
      %561 = vmatmul.bf16.gmra.mxu0 %v457
      %v562 = vpop.f32.mrf.mxu0
      %v563 = vadd.f32 %v483, %v562
      %v564 = vpop.f32.mrf.mxu0
      %v565 = vadd.f32 %v483, %v564
      %566 = vmatmul.bf16.gmra.mxu0 %v458
      %v567 = vpop.f32.mrf.mxu0
      %v568 = vadd.f32 %v483, %v567
      %v569 = vpop.f32.mrf.mxu0
      %v570 = vadd.f32 %v483, %v569
      %571 = vmatmul.bf16.gmra.mxu0 %v459
      %v572 = vpop.f32.mrf.mxu0
      %v573 = vadd.f32 %v483, %v572
      %v574 = vpop.f32.mrf.mxu0
      %v575 = vadd.f32 %v483, %v574
      %576 = vmatmul.bf16.gmra.mxu0 %v460
      %v577 = vpop.f32.mrf.mxu0
      %v578 = vadd.f32 %v483, %v577
      %v579 = vpop.f32.mrf.mxu0
      %v580 = vadd.f32 %v483, %v579
      %581 = vdwg.mxu0
      %v582 = vsub.f32 0.0, %v543
      %v583 = vsub.f32 0.0, %v545
      %v584 = vsub.f32 0.0, %v548
      %v585 = vsub.f32 0.0, %v550
      %v586 = vsub.f32 0.0, %v553
      %v587 = vsub.f32 0.0, %v555
      %v588 = vsub.f32 0.0, %v558
      %v589 = vsub.f32 0.0, %v560
      %v590 = vsub.f32 0.0, %v563
      %v591 = vsub.f32 0.0, %v565
      %v592 = vsub.f32 0.0, %v568
      %v593 = vsub.f32 0.0, %v570
      %v594 = vsub.f32 0.0, %v573
      %v595 = vsub.f32 0.0, %v575
      %v596 = vsub.f32 0.0, %v578
      %v597 = vsub.f32 0.0, %v580
      %v598 = vmul.f32 %v582, 1.442695
      %v599 = vpow.pop %v598
      %v600 = vmul.f32 %v583, 1.442695
      %v601 = vpow.pop %v600
      %v602 = vmul.f32 %v584, 1.442695
      %v603 = vpow.pop %v602
      %v604 = vmul.f32 %v585, 1.442695
      %v605 = vpow.pop %v604
      %v606 = vmul.f32 %v586, 1.442695
      %v607 = vpow.pop %v606
      %v608 = vmul.f32 %v587, 1.442695
      %v609 = vpow.pop %v608
      %v610 = vmul.f32 %v588, 1.442695
      %v611 = vpow.pop %v610
      %v612 = vmul.f32 %v589, 1.442695
      %v613 = vpow.pop %v612
      %v614 = vmul.f32 %v590, 1.442695
      %v615 = vpow.pop %v614
      %v616 = vmul.f32 %v591, 1.442695
      %v617 = vpow.pop %v616
      %v618 = vmul.f32 %v592, 1.442695
      %v619 = vpow.pop %v618
      %v620 = vmul.f32 %v593, 1.442695
      %v621 = vpow.pop %v620
      %v622 = vmul.f32 %v594, 1.442695
      %v623 = vpow.pop %v622
      %v624 = vmul.f32 %v595, 1.442695
      %v625 = vpow.pop %v624
      %v626 = vmul.f32 %v596, 1.442695
      %v627 = vpow.pop %v626
      %v628 = vmul.f32 %v597, 1.442695
      %v629 = vpow.pop %v628
      %v630 = vadd.f32 %v599, 1.0
      %v631 = vadd.f32 %v601, 1.0
      %v632 = vadd.f32 %v603, 1.0
      %v633 = vadd.f32 %v605, 1.0
      %v634 = vadd.f32 %v607, 1.0
      %v635 = vadd.f32 %v609, 1.0
      %v636 = vadd.f32 %v611, 1.0
      %v637 = vadd.f32 %v613, 1.0
      %v638 = vadd.f32 %v615, 1.0
      %v639 = vadd.f32 %v617, 1.0
      %v640 = vadd.f32 %v619, 1.0
      %v641 = vadd.f32 %v621, 1.0
      %v642 = vadd.f32 %v623, 1.0
      %v643 = vadd.f32 %v625, 1.0
      %v644 = vadd.f32 %v627, 1.0
      %v645 = vadd.f32 %v629, 1.0
      %v646 = vrcp.pop %v630
      %v647 = vrcp.pop %v631
      %v648 = vrcp.pop %v632
      %v649 = vrcp.pop %v633
      %v650 = vrcp.pop %v634
      %v651 = vrcp.pop %v635
      %v652 = vrcp.pop %v636
      %v653 = vrcp.pop %v637
      %v654 = vrcp.pop %v638
      %v655 = vrcp.pop %v639
      %v656 = vrcp.pop %v640
      %v657 = vrcp.pop %v641
      %v658 = vrcp.pop %v642
      %v659 = vrcp.pop %v643
      %v660 = vrcp.pop %v644
      %v661 = vrcp.pop %v645
      %v662 = vmul.f32 %v543, %v646
      %v663 = vmul.f32 %v545, %v647
      %v664 = vmul.f32 %v548, %v648
      %v665 = vmul.f32 %v550, %v649
      %v666 = vmul.f32 %v553, %v650
      %v667 = vmul.f32 %v555, %v651
      %v668 = vmul.f32 %v558, %v652
      %v669 = vmul.f32 %v560, %v653
      %v670 = vmul.f32 %v563, %v654
      %v671 = vmul.f32 %v565, %v655
      %v672 = vmul.f32 %v568, %v656
      %v673 = vmul.f32 %v570, %v657
      %v674 = vmul.f32 %v573, %v658
      %v675 = vmul.f32 %v575, %v659
      %v676 = vmul.f32 %v578, %v660
      %v677 = vmul.f32 %v580, %v661
      %v678 = vld [vmem:[#allocation2] sm:$0xff]
      %v679 = vld [vmem:[#allocation2 + $0x8] sm:$0xff]
      %v680 = vld [vmem:[#allocation2 + $0x10] sm:$0xff]
      %v681 = vld [vmem:[#allocation2 + $0x18] sm:$0xff]
      %v682 = vld [vmem:[#allocation2 + $0x20] sm:$0xff]
      %v683 = vld [vmem:[#allocation2 + $0x28] sm:$0xff]
      %v684 = vld [vmem:[#allocation2 + $0x30] sm:$0xff]
      %v685 = vld [vmem:[#allocation2 + $0x38] sm:$0xff]
      %v686 = vld [vmem:[#allocation2 + $0x40] sm:$0xff]
      %v687 = vld [vmem:[#allocation2 + $0x48] sm:$0xff]
      %v688 = vld [vmem:[#allocation2 + $0x50] sm:$0xff]
      %v689 = vld [vmem:[#allocation2 + $0x58] sm:$0xff]
      %v690 = vld [vmem:[#allocation2 + $0x60] sm:$0xff]
      %v691 = vld [vmem:[#allocation2 + $0x68] sm:$0xff]
      %v692 = vld [vmem:[#allocation2 + $0x70] sm:$0xff]
      %v693 = vld [vmem:[#allocation2 + $0x78] sm:$0xff]
      %v694 = vpack.c.bf16 %v663, %v662
      %v695 = vpack.c.bf16 %v665, %v664
      %v696 = vpack.c.bf16 %v667, %v666
      %v697 = vpack.c.bf16 %v669, %v668
      %v698 = vpack.c.bf16 %v671, %v670
      %v699 = vpack.c.bf16 %v673, %v672
      %v700 = vpack.c.bf16 %v675, %v674
      %v701 = vpack.c.bf16 %v677, %v676
      %v702 = vld [vmem:[%s408] sm:$0xf]
      %v703 = vld [vmem:[%s408 + $0x4] sm:$0xf]
      %v704 = vld [vmem:[%s408 + $0x8] sm:$0xf]
      %v705 = vld [vmem:[%s408 + $0xc] sm:$0xf]
      %v706 = vld [vmem:[%s408 + $0x10] sm:$0xf]
      %v707 = vld [vmem:[%s408 + $0x14] sm:$0xf]
      %v708 = vld [vmem:[%s408 + $0x18] sm:$0xf]
      %v709 = vld [vmem:[%s408 + $0x1c] sm:$0xf]
      %v710 = vld [vmem:[%s408 + $0x20] sm:$0xf]
      %v711 = vld [vmem:[%s408 + $0x24] sm:$0xf]
      %v712 = vld [vmem:[%s408 + $0x28] sm:$0xf]
      %v713 = vld [vmem:[%s408 + $0x2c] sm:$0xf]
      %v714 = vld [vmem:[%s408 + $0x30] sm:$0xf]
      %v715 = vld [vmem:[%s408 + $0x34] sm:$0xf]
      %v716 = vld [vmem:[%s408 + $0x38] sm:$0xf]
      %v717 = vld [vmem:[%s408 + $0x3c] sm:$0xf]
      %v734 = vunpack.c.l.b16 %v702
      %v735 = vunpack.c.l.b16 %v703
      %v736 = vunpack.c.l.b16 %v704
      %v737 = vunpack.c.l.b16 %v705
      %v738 = vunpack.c.l.b16 %v706
      %v739 = vunpack.c.l.b16 %v707
      %v740 = vunpack.c.l.b16 %v708
      %v741 = vunpack.c.l.b16 %v709
      %v742 = vunpack.c.l.b16 %v710
      %v743 = vunpack.c.l.b16 %v711
      %v744 = vunpack.c.l.b16 %v712
      %v745 = vunpack.c.l.b16 %v713
      %v746 = vunpack.c.l.b16 %v714
      %v747 = vunpack.c.l.b16 %v715
      %v748 = vunpack.c.l.b16 %v716
      %v749 = vunpack.c.l.b16 %v717
      %v750 = vpack.c.b16 %v735, %v734
      %v751 = vpack.c.b16 %v737, %v736
      %v752 = vpack.c.b16 %v739, %v738
      %v753 = vpack.c.b16 %v741, %v740
      %v754 = vpack.c.b16 %v743, %v742
      %v755 = vpack.c.b16 %v745, %v744
      %v756 = vpack.c.b16 %v747, %v746
      %v757 = vpack.c.b16 %v749, %v748
      %766 = vmatpush.bf16.msra.mxu0 %v757
      %767 = vmatpush.bf16.msra.mxu0 %v756
      %768 = vmatpush.bf16.msra.mxu0 %v755
      %769 = vmatpush.bf16.msra.mxu0 %v754
      %770 = vmatpush.bf16.msra.mxu0 %v753
      %771 = vmatpush.bf16.msra.mxu0 %v752
      %772 = vmatpush.bf16.msra.mxu0 %v751
      %773 = vmatpush.bf16.msra.mxu0 %v750
      %774 = vmatmul.bf16.gmra.mxu0 %v694
      %v775 = vpop.f32.mrf.mxu0
      %v776 = vadd.f32 0.0, %v775
      %v777 = vpop.f32.mrf.mxu0
      %v778 = vadd.f32 0.0, %v777
      %779 = vmatmul.bf16.gmra.mxu0 %v695
      %v780 = vpop.f32.mrf.mxu0
      %v781 = vadd.f32 0.0, %v780
      %v782 = vpop.f32.mrf.mxu0
      %v783 = vadd.f32 0.0, %v782
      %784 = vmatmul.bf16.gmra.mxu0 %v696
      %v785 = vpop.f32.mrf.mxu0
      %v786 = vadd.f32 0.0, %v785
      %v787 = vpop.f32.mrf.mxu0
      %v788 = vadd.f32 0.0, %v787
      %789 = vmatmul.bf16.gmra.mxu0 %v697
      %v790 = vpop.f32.mrf.mxu0
      %v791 = vadd.f32 0.0, %v790
      %v792 = vpop.f32.mrf.mxu0
      %v793 = vadd.f32 0.0, %v792
      %794 = vmatmul.bf16.gmra.mxu0 %v698
      %v795 = vpop.f32.mrf.mxu0
      %v796 = vadd.f32 0.0, %v795
      %v797 = vpop.f32.mrf.mxu0
      %v798 = vadd.f32 0.0, %v797
      %799 = vmatmul.bf16.gmra.mxu0 %v699
      %v800 = vpop.f32.mrf.mxu0
      %v801 = vadd.f32 0.0, %v800
      %v802 = vpop.f32.mrf.mxu0
      %v803 = vadd.f32 0.0, %v802
      %804 = vmatmul.bf16.gmra.mxu0 %v700
      %v805 = vpop.f32.mrf.mxu0
      %v806 = vadd.f32 0.0, %v805
      %v807 = vpop.f32.mrf.mxu0
      %v808 = vadd.f32 0.0, %v807
      %809 = vmatmul.bf16.gmra.mxu0 %v701
      %v810 = vpop.f32.mrf.mxu0
      %v811 = vadd.f32 0.0, %v810
      %v812 = vpop.f32.mrf.mxu0
      %v813 = vadd.f32 0.0, %v812
      %814 = vdwg.mxu0
      %v815 = vadd.f32 %v678, %v776
      %v816 = vadd.f32 %v679, %v778
      %v817 = vadd.f32 %v680, %v781
      %v818 = vadd.f32 %v681, %v783
      %v819 = vadd.f32 %v682, %v786
      %v820 = vadd.f32 %v683, %v788
      %v821 = vadd.f32 %v684, %v791
      %v822 = vadd.f32 %v685, %v793
      %v823 = vadd.f32 %v686, %v796
      %v824 = vadd.f32 %v687, %v798
      %v825 = vadd.f32 %v688, %v801
      %v826 = vadd.f32 %v689, %v803
      %v827 = vadd.f32 %v690, %v806
      %v828 = vadd.f32 %v691, %v808
      %v829 = vadd.f32 %v692, %v811
      %v830 = vadd.f32 %v693, %v813
      %831 = vst [vmem:[#allocation2] sm:$0xff] %v815
      %832 = vst [vmem:[#allocation2 + $0x8] sm:$0xff] %v816
      %833 = vst [vmem:[#allocation2 + $0x10] sm:$0xff] %v817
      %834 = vst [vmem:[#allocation2 + $0x18] sm:$0xff] %v818
      %835 = vst [vmem:[#allocation2 + $0x20] sm:$0xff] %v819
      %836 = vst [vmem:[#allocation2 + $0x28] sm:$0xff] %v820
      %837 = vst [vmem:[#allocation2 + $0x30] sm:$0xff] %v821
      %838 = vst [vmem:[#allocation2 + $0x38] sm:$0xff] %v822
      %839 = vst [vmem:[#allocation2 + $0x40] sm:$0xff] %v823
      %840 = vst [vmem:[#allocation2 + $0x48] sm:$0xff] %v824
      %841 = vst [vmem:[#allocation2 + $0x50] sm:$0xff] %v825
      %842 = vst [vmem:[#allocation2 + $0x58] sm:$0xff] %v826
      %843 = vst [vmem:[#allocation2 + $0x60] sm:$0xff] %v827
      %844 = vst [vmem:[#allocation2 + $0x68] sm:$0xff] %v828
      %845 = vst [vmem:[#allocation2 + $0x70] sm:$0xff] %v829
      %846 = vst [vmem:[#allocation2 + $0x78] sm:$0xff] %v830
      // Predicated region
      $region61: #{flow_model_wrapper_forward.1} parent=55 // pred_check
        %p847 = pneg %p416
      $region62: #{flow_model_wrapper_forward.1} parent=55 // pred_check_branch
        %849 = sbr.rel (%p847) target = $region64
      $region63: #{flow_model_wrapper_forward.1} parent=55 // pred_region
        %v850 = vld [vmem:[#allocation2] sm:$0xff]
        %v851 = vld [vmem:[#allocation2 + $0x8] sm:$0xff]
        %v852 = vld [vmem:[#allocation2 + $0x10] sm:$0xff]
        %v853 = vld [vmem:[#allocation2 + $0x18] sm:$0xff]
        %v854 = vld [vmem:[#allocation2 + $0x20] sm:$0xff]
        %v855 = vld [vmem:[#allocation2 + $0x28] sm:$0xff]
        %v856 = vld [vmem:[#allocation2 + $0x30] sm:$0xff]
        %v857 = vld [vmem:[#allocation2 + $0x38] sm:$0xff]
        %v858 = vld [vmem:[#allocation2 + $0x40] sm:$0xff]
        %v859 = vld [vmem:[#allocation2 + $0x48] sm:$0xff]
        %v860 = vld [vmem:[#allocation2 + $0x50] sm:$0xff]
        %v861 = vld [vmem:[#allocation2 + $0x58] sm:$0xff]
        %v862 = vld [vmem:[#allocation2 + $0x60] sm:$0xff]
        %v863 = vld [vmem:[#allocation2 + $0x68] sm:$0xff]
        %v864 = vld [vmem:[#allocation2 + $0x70] sm:$0xff]
        %v865 = vld [vmem:[#allocation2 + $0x78] sm:$0xff]
        %v866 = vld [vmem:[%s6] sm:$0x1]
        %v868 = vperm.slane %v866, 0
        %v870 = vadd.f32 %v850, %v868
        %v871 = vadd.f32 %v851, %v868
        %v872 = vadd.f32 %v852, %v868
        %v873 = vadd.f32 %v853, %v868
        %v874 = vadd.f32 %v854, %v868
        %v875 = vadd.f32 %v855, %v868
        %v876 = vadd.f32 %v856, %v868
        %v877 = vadd.f32 %v857, %v868
        %v878 = vadd.f32 %v858, %v868
        %v879 = vadd.f32 %v859, %v868
        %v880 = vadd.f32 %v860, %v868
        %v881 = vadd.f32 %v861, %v868
        %v882 = vadd.f32 %v862, %v868
        %v883 = vadd.f32 %v863, %v868
        %v884 = vadd.f32 %v864, %v868
        %v885 = vadd.f32 %v865, %v868
        %v886 = vsub.f32 0.0, %v870
        %v887 = vsub.f32 0.0, %v871
        %v888 = vsub.f32 0.0, %v872
        %v889 = vsub.f32 0.0, %v873
        %v890 = vsub.f32 0.0, %v874
        %v891 = vsub.f32 0.0, %v875
        %v892 = vsub.f32 0.0, %v876
        %v893 = vsub.f32 0.0, %v877
        %v894 = vsub.f32 0.0, %v878
        %v895 = vsub.f32 0.0, %v879
        %v896 = vsub.f32 0.0, %v880
        %v897 = vsub.f32 0.0, %v881
        %v898 = vsub.f32 0.0, %v882
        %v899 = vsub.f32 0.0, %v883
        %v900 = vsub.f32 0.0, %v884
        %v901 = vsub.f32 0.0, %v885
        %v902 = vmul.f32 %v886, 1.442695
        %v903 = vpow.pop %v902
        %v904 = vmul.f32 %v887, 1.442695
        %v905 = vpow.pop %v904
        %v906 = vmul.f32 %v888, 1.442695
        %v907 = vpow.pop %v906
        %v908 = vmul.f32 %v889, 1.442695
        %v909 = vpow.pop %v908
        %v910 = vmul.f32 %v890, 1.442695
        %v911 = vpow.pop %v910
        %v912 = vmul.f32 %v891, 1.442695
        %v913 = vpow.pop %v912
        %v914 = vmul.f32 %v892, 1.442695
        %v915 = vpow.pop %v914
        %v916 = vmul.f32 %v893, 1.442695
        %v917 = vpow.pop %v916
        %v918 = vmul.f32 %v894, 1.442695
        %v919 = vpow.pop %v918
        %v920 = vmul.f32 %v895, 1.442695
        %v921 = vpow.pop %v920
        %v922 = vmul.f32 %v896, 1.442695
        %v923 = vpow.pop %v922
        %v924 = vmul.f32 %v897, 1.442695
        %v925 = vpow.pop %v924
        %v926 = vmul.f32 %v898, 1.442695
        %v927 = vpow.pop %v926
        %v928 = vmul.f32 %v899, 1.442695
        %v929 = vpow.pop %v928
        %v930 = vmul.f32 %v900, 1.442695
        %v931 = vpow.pop %v930
        %v932 = vmul.f32 %v901, 1.442695
        %v933 = vpow.pop %v932
        %v934 = vadd.f32 %v903, 1.0
        %v935 = vadd.f32 %v905, 1.0
        %v936 = vadd.f32 %v907, 1.0
        %v937 = vadd.f32 %v909, 1.0
        %v938 = vadd.f32 %v911, 1.0
        %v939 = vadd.f32 %v913, 1.0
        %v940 = vadd.f32 %v915, 1.0
        %v941 = vadd.f32 %v917, 1.0
        %v942 = vadd.f32 %v919, 1.0
        %v943 = vadd.f32 %v921, 1.0
        %v944 = vadd.f32 %v923, 1.0
        %v945 = vadd.f32 %v925, 1.0
        %v946 = vadd.f32 %v927, 1.0
        %v947 = vadd.f32 %v929, 1.0
        %v948 = vadd.f32 %v931, 1.0
        %v949 = vadd.f32 %v933, 1.0
        %v950 = vrcp.pop %v934
        %v951 = vrcp.pop %v935
        %v952 = vrcp.pop %v936
        %v953 = vrcp.pop %v937
        %v954 = vrcp.pop %v938
        %v955 = vrcp.pop %v939
        %v956 = vrcp.pop %v940
        %v957 = vrcp.pop %v941
        %v958 = vrcp.pop %v942
        %v959 = vrcp.pop %v943
        %v960 = vrcp.pop %v944
        %v961 = vrcp.pop %v945
        %v962 = vrcp.pop %v946
        %v963 = vrcp.pop %v947
        %v964 = vrcp.pop %v948
        %v965 = vrcp.pop %v949
        %v966 = vmul.f32 %v870, %v950
        %v967 = vmul.f32 %v871, %v951
        %v968 = vmul.f32 %v872, %v952
        %v969 = vmul.f32 %v873, %v953
        %v970 = vmul.f32 %v874, %v954
        %v971 = vmul.f32 %v875, %v955
        %v972 = vmul.f32 %v876, %v956
        %v973 = vmul.f32 %v877, %v957
        %v974 = vmul.f32 %v878, %v958
        %v975 = vmul.f32 %v879, %v959
        %v976 = vmul.f32 %v880, %v960
        %v977 = vmul.f32 %v881, %v961
        %v978 = vmul.f32 %v882, %v962
        %v979 = vmul.f32 %v883, %v963
        %v980 = vmul.f32 %v884, %v964
        %v981 = vmul.f32 %v885, %v965
        %v982 = vpack.c.bf16 %v967, %v966
        %v983 = vpack.c.bf16 %v969, %v968
        %v984 = vpack.c.bf16 %v971, %v970
        %v985 = vpack.c.bf16 %v973, %v972
        %v986 = vpack.c.bf16 %v975, %v974
        %v987 = vpack.c.bf16 %v977, %v976
        %v988 = vpack.c.bf16 %v979, %v978
        %v989 = vpack.c.bf16 %v981, %v980
        %v990 = vld [vmem:[%s7] sm:$0xf]
        %v991 = vld [vmem:[%s7 + $0x4] sm:$0xf]
        %v992 = vld [vmem:[%s7 + $0x8] sm:$0xf]
        %v993 = vld [vmem:[%s7 + $0xc] sm:$0xf]
        %v994 = vld [vmem:[%s7 + $0x10] sm:$0xf]
        %v995 = vld [vmem:[%s7 + $0x14] sm:$0xf]
        %v996 = vld [vmem:[%s7 + $0x18] sm:$0xf]
        %v997 = vld [vmem:[%s7 + $0x1c] sm:$0xf]
        %v998 = vld [vmem:[%s7 + $0x20] sm:$0xf]
        %v999 = vld [vmem:[%s7 + $0x24] sm:$0xf]
        %v1000 = vld [vmem:[%s7 + $0x28] sm:$0xf]
        %v1001 = vld [vmem:[%s7 + $0x2c] sm:$0xf]
        %v1002 = vld [vmem:[%s7 + $0x30] sm:$0xf]
        %v1003 = vld [vmem:[%s7 + $0x34] sm:$0xf]
        %v1004 = vld [vmem:[%s7 + $0x38] sm:$0xf]
        %v1005 = vld [vmem:[%s7 + $0x3c] sm:$0xf]
        %v1006 = vld [vmem:[%s8] sm:$0x1]
        %v1008 = vperm.slane %v1006, 0
        %v1026 = vunpack.c.l.b16 %v990
        %v1027 = vunpack.c.l.b16 %v991
        %v1028 = vunpack.c.l.b16 %v992
        %v1029 = vunpack.c.l.b16 %v993
        %v1030 = vunpack.c.l.b16 %v994
        %v1031 = vunpack.c.l.b16 %v995
        %v1032 = vunpack.c.l.b16 %v996
        %v1033 = vunpack.c.l.b16 %v997
        %v1034 = vunpack.c.l.b16 %v998
        %v1035 = vunpack.c.l.b16 %v999
        %v1036 = vunpack.c.l.b16 %v1000
        %v1037 = vunpack.c.l.b16 %v1001
        %v1038 = vunpack.c.l.b16 %v1002
        %v1039 = vunpack.c.l.b16 %v1003
        %v1040 = vunpack.c.l.b16 %v1004
        %v1041 = vunpack.c.l.b16 %v1005
        %v1042 = vpack.c.b16 %v1027, %v1026
        %v1043 = vpack.c.b16 %v1029, %v1028
        %v1044 = vpack.c.b16 %v1031, %v1030
        %v1045 = vpack.c.b16 %v1033, %v1032
        %v1046 = vpack.c.b16 %v1035, %v1034
        %v1047 = vpack.c.b16 %v1037, %v1036
        %v1048 = vpack.c.b16 %v1039, %v1038
        %v1049 = vpack.c.b16 %v1041, %v1040
        %1058 = vmatpush.bf16.msra.mxu0 %v1049
        %1059 = vmatpush.bf16.msra.mxu0 %v1048
        %1060 = vmatpush.bf16.msra.mxu0 %v1047
        %1061 = vmatpush.bf16.msra.mxu0 %v1046
        %1062 = vmatpush.bf16.msra.mxu0 %v1045
        %1063 = vmatpush.bf16.msra.mxu0 %v1044
        %1064 = vmatpush.bf16.msra.mxu0 %v1043
        %1065 = vmatpush.bf16.msra.mxu0 %v1042
        %1066 = vmatmul.bf16.gmra.mxu0 %v982
        %v1067 = vpop.f32.mrf.mxu0
        %v1068 = vadd.f32 %v1008, %v1067
        %v1069 = vpop.f32.mrf.mxu0
        %v1070 = vadd.f32 %v1008, %v1069
        %1071 = vmatmul.bf16.gmra.mxu0 %v983
        %v1072 = vpop.f32.mrf.mxu0
        %v1073 = vadd.f32 %v1008, %v1072
        %v1074 = vpop.f32.mrf.mxu0
        %v1075 = vadd.f32 %v1008, %v1074
        %1076 = vmatmul.bf16.gmra.mxu0 %v984
        %v1077 = vpop.f32.mrf.mxu0
        %v1078 = vadd.f32 %v1008, %v1077
        %v1079 = vpop.f32.mrf.mxu0
        %v1080 = vadd.f32 %v1008, %v1079
        %1081 = vmatmul.bf16.gmra.mxu0 %v985
        %v1082 = vpop.f32.mrf.mxu0
        %v1083 = vadd.f32 %v1008, %v1082
        %v1084 = vpop.f32.mrf.mxu0
        %v1085 = vadd.f32 %v1008, %v1084
        %1086 = vmatmul.bf16.gmra.mxu0 %v986
        %v1087 = vpop.f32.mrf.mxu0
        %v1088 = vadd.f32 %v1008, %v1087
        %v1089 = vpop.f32.mrf.mxu0
        %v1090 = vadd.f32 %v1008, %v1089
        %1091 = vmatmul.bf16.gmra.mxu0 %v987
        %v1092 = vpop.f32.mrf.mxu0
        %v1093 = vadd.f32 %v1008, %v1092
        %v1094 = vpop.f32.mrf.mxu0
        %v1095 = vadd.f32 %v1008, %v1094
        %1096 = vmatmul.bf16.gmra.mxu0 %v988
        %v1097 = vpop.f32.mrf.mxu0
        %v1098 = vadd.f32 %v1008, %v1097
        %v1099 = vpop.f32.mrf.mxu0
        %v1100 = vadd.f32 %v1008, %v1099
        %1101 = vmatmul.bf16.gmra.mxu0 %v989
        %v1102 = vpop.f32.mrf.mxu0
        %v1103 = vadd.f32 %v1008, %v1102
        %v1104 = vpop.f32.mrf.mxu0
        %v1105 = vadd.f32 %v1008, %v1104
        %1106 = vdwg.mxu0
        %1107 = vst [vmem:[%s414] sm:$0xff] %v1068
        %1108 = vst [vmem:[%s414 + $0x8] sm:$0xff] %v1070
        %1109 = vst [vmem:[%s414 + $0x10] sm:$0xff] %v1073
        %1110 = vst [vmem:[%s414 + $0x18] sm:$0xff] %v1075
        %1111 = vst [vmem:[%s414 + $0x20] sm:$0xff] %v1078
        %1112 = vst [vmem:[%s414 + $0x28] sm:$0xff] %v1080
        %1113 = vst [vmem:[%s414 + $0x30] sm:$0xff] %v1083
        %1114 = vst [vmem:[%s414 + $0x38] sm:$0xff] %v1085
        %1115 = vst [vmem:[%s414 + $0x40] sm:$0xff] %v1088
        %1116 = vst [vmem:[%s414 + $0x48] sm:$0xff] %v1090
        %1117 = vst [vmem:[%s414 + $0x50] sm:$0xff] %v1093
        %1118 = vst [vmem:[%s414 + $0x58] sm:$0xff] %v1095
        %1119 = vst [vmem:[%s414 + $0x60] sm:$0xff] %v1098
        %1120 = vst [vmem:[%s414 + $0x68] sm:$0xff] %v1100
        %1121 = vst [vmem:[%s414 + $0x70] sm:$0xff] %v1103
        %1122 = vst [vmem:[%s414 + $0x78] sm:$0xff] %v1105
      $region64: #{flow_model_wrapper_forward.1} parent=55 // pred_fallthru
        _
      %s1123 = smul.u32 16, %s25
      %p1124 = scmp.lt.s32.totalorder %s1123, 31
      %s1125 = scalar_select %p1124, %s1123, 31
      %s1126 = smul.addr %s1125, 8
      %s1127 = scalar_lea.vmem %s9, %s1126
      // Predicated region
      $region65: #{flow_model_wrapper_forward.1} parent=55 // pred_check
        %p1128 = pneg %p265
      $region66: #{flow_model_wrapper_forward.1} parent=55 // pred_check_branch
        %1130 = sbr.rel (%p1128) target = $region68
      $region67: #{flow_model_wrapper_forward.1} parent=55 // pred_region
        %s1131 = smul.u32 16, %s25
      $region68: #{flow_model_wrapper_forward.1} parent=55 // pred_fallthru
        _
    $region56: #{flow_model_wrapper_forward.1} parent=5 // pred_fallthru
      _
    %p1132 = scmp.le.s32.totalorder 2, %s16
    // Predicated region
    $region69: #{flow_model_wrapper_forward.1} parent=5 // pred_check
      %p1133 = pneg %p1132
    $region70: #{flow_model_wrapper_forward.1} parent=5 // pred_check_branch
      %1135 = sbr.rel (%p1133) target = $region72
    $region71: #{flow_model_wrapper_forward.1} parent=5 // pred_region
      %s1136 = ssub.s32 %s16, 2
      // Predicated region
      $region73: #{flow_model_wrapper_forward.1} parent=71 // pred_check
        %p1137 = pneg %p271
      $region74: #{flow_model_wrapper_forward.1} parent=71 // pred_check_branch
        %1139 = sbr.rel (%p1137) target = $region76
      $region75: #{flow_model_wrapper_forward.1} parent=71 // pred_region
        %s1140 = smul.u32 16, %s27
        %p1141 = scmp.lt.s32.totalorder %s1140, 31
        %s1142 = scalar_select %p1141, %s1140, 31
        %s1143 = smul.addr %s1142, 8
        %s1144 = scalar_lea.vmem %s9, %s1143
      $region76: #{flow_model_wrapper_forward.1} parent=71 // pred_fallthru
        _
    $region72: #{flow_model_wrapper_forward.1} parent=5 // pred_fallthru
      _
  $region6: #{flow_model_wrapper_forward.1} parent=0 // loop_footer
    %s20 = sadd.s32 1, %s16
  $region7: #{flow_model_wrapper_forward.1} parent=0 // loop_footer_branch
    %15 = sbr.rel target = $region3
  $region8: #{flow_model_wrapper_forward.1} parent=0 // loop_exit
    _

</llo_original>
